<compile_context>
chip_gen: v7x
topology: tpu7x:2x2x1
jax: 0.10.0
libtpu: 0.0.40
codegen_flags: <defaults>
</compile_context>

<pallas_src>
import jax
import jax.numpy as jnp
from jax import lax
from jax.experimental import pallas as pl
from jax.experimental.pallas import tpu as pltpu

LANE = 128  # TPU lane width


def valuenet_kernel(stateT_ref, actionT_ref, w1T_ref, b1_ref, w2T_ref, b2_ref,
                    out_ref):
    # stateT: (S, TB)   actionT: (1, TB) int32
    # w1T: (H, S)  b1: (H, 1)   w2T: (A, H)  b2: (A, 1)   out: (1, TB)
    xT = stateT_ref[...]

    # linear1 + ReLU (MXU matmul, f32 accumulation); batch on the lane axis.
    hT = jnp.dot(w1T_ref[...], xT, preferred_element_type=jnp.float32)
    hT = jnp.maximum(hT + b1_ref[...], 0.0)                      # (H, TB)

    # linear2
    qT = jnp.dot(w2T_ref[...], hT, preferred_element_type=jnp.float32)
    qT = qT + b2_ref[...]                                        # (A, TB)

    # gather along the action axis: one-hot mask over sublanes, cross-sublane
    # reduce down to a single lane-dense row.
    a_row = actionT_ref[...]                                     # (1, TB)
    rows = lax.broadcasted_iota(jnp.int32, qT.shape, 0)          # (A, TB)
    v = jnp.sum(jnp.where(rows == a_row, qT, 0.0),
                axis=0, keepdims=True)                           # (1, TB)

    out_ref[...] = v.astype(out_ref.dtype)


def value_net_forward(state, action, w1, b1, w2, b2, *, tile_b=512):
    """state: (B, S) f32, action: (B,) int -> (B,) f32.

    Params stored as in the PyTorch module but pre-transposed to
    (in_dim, out_dim): w1 (S, H), b1 (H,), w2 (H, A), b2 (A,).
    """
    B, S = state.shape
    H = w1.shape[1]
    A = w2.shape[1]

    # Batch tile: multiple of the 128-lane width, capped at `tile_b`.
    tb = max(LANE, (min(tile_b, max(B, LANE)) // LANE) * LANE)
    b_pad = pl.cdiv(B, tb) * tb
    num_tiles = b_pad // tb

    # Wrapper-side layout plumbing: batch -> lanes, pad batch to b_pad.
    stateT = jnp.zeros((S, b_pad), state.dtype).at[:, :B].set(state.T)
    actionT = jnp.zeros((1, b_pad), jnp.int32).at[:, :B].set(
        action.reshape(1, B).astype(jnp.int32))
    w1T = w1.T                    # (H, S)
    w2T = w2.T                    # (A, H)
    b1c = b1.reshape(H, 1)
    b2c = b2.reshape(A, 1)

    out = pl.pallas_call(
        valuenet_kernel,
        out_shape=jax.ShapeDtypeStruct((1, b_pad), jnp.float32),
        grid_spec=pltpu.PrefetchScalarGridSpec(
            num_scalar_prefetch=0,
            grid=(num_tiles,),
            in_specs=[
                pl.BlockSpec((S, tb), lambda i: (0, i)),   # state tile
                pl.BlockSpec((1, tb), lambda i: (0, i)),   # action tile
                pl.BlockSpec((H, S), lambda i: (0, 0)),    # VMEM-resident
                pl.BlockSpec((H, 1), lambda i: (0, 0)),    # weights / biases
                pl.BlockSpec((A, H), lambda i: (0, 0)),
                pl.BlockSpec((A, 1), lambda i: (0, 0)),
            ],
            out_specs=pl.BlockSpec((1, tb), lambda i: (0, i)),
        ),
        compiler_params=pltpu.CompilerParams(
            dimension_semantics=("parallel",)),   # v7x: 2 TCs; no-op v5e/v6e
    )(stateT, actionT, w1T, b1c, w2T, b2c)
    return out.reshape(-1)[:B]


def init_params(key, state_dim, n_action, hidden_dim):
    """Deterministic init mimicking nn.Linear's U(-1/sqrt(fan_in), +...)."""
    k1, k2, k3, k4 = jax.random.split(key, 4)
    bound1 = 1.0 / jnp.sqrt(state_dim)
    bound2 = 1.0 / jnp.sqrt(hidden_dim)
    # stored pre-transposed: (in_dim, out_dim)
    w1 = jax.random.uniform(k1, (state_dim, hidden_dim), jnp.float32,
                            -bound1, bound1)
    b1 = jax.random.uniform(k2, (hidden_dim,), jnp.float32, -bound1, bound1)
    w2 = jax.random.uniform(k3, (hidden_dim, n_action), jnp.float32,
                            -bound2, bound2)
    b2 = jax.random.uniform(k4, (n_action,), jnp.float32, -bound2, bound2)
    return w1, b1, w2, b2


if __name__ == "__main__":
    STATE_DIM = 16
    N_ACTION = 4
    HIDDEN_DIM = 32
    BATCH = 8

    key = jax.random.PRNGKey(0)
    k_param, k_state, k_action = jax.random.split(key, 3)

    w1, b1, w2, b2 = init_params(k_param, STATE_DIM, N_ACTION, HIDDEN_DIM)
    state = jax.random.normal(k_state, (BATCH, STATE_DIM), jnp.float32)
    action = jax.random.randint(k_action, (BATCH,), 0, N_ACTION, jnp.int32)

    v = value_net_forward(state, action, w1, b1, w2, b2)
    v = jax.block_until_ready(v)

    # reference check in plain JAX
    q_ref = jnp.maximum(state @ w1 + b1, 0.0) @ w2 + b2
    v_ref = jnp.take_along_axis(q_ref, action.reshape(-1, 1), axis=1).reshape(-1)
    assert v.shape == (BATCH,)
    assert jnp.allclose(v, v_ref, atol=1e-5, rtol=1e-5)

    print("KERNEL_OK")
</pallas_src>

<mosaic_0001>
module attributes {stable_mosaic.version = 11 : i64} {
  func.func @valuenet_kernel(%arg0: i32, %arg1: memref<16x128xf32, #tpu.memory_space<vmem>>, %arg2: memref<1x128xi32, #tpu.memory_space<vmem>>, %arg3: memref<32x16xf32, #tpu.memory_space<vmem>>, %arg4: memref<32x1xf32, #tpu.memory_space<vmem>>, %arg5: memref<4x32xf32, #tpu.memory_space<vmem>>, %arg6: memref<4x1xf32, #tpu.memory_space<vmem>>, %arg7: memref<1x128xf32, #tpu.memory_space<vmem>>) attributes {dimension_semantics = [#tpu.dimension_semantics<parallel>], iteration_bounds = array<i64: 1>, scalar_prefetch = 0 : i64, scratch_operands = 0 : i64, tpu.core_type = #tpu.core_type<tc>, window_params = [{transform_indices = @transform_0, window_bounds = array<i64: 16, 128>}, {transform_indices = @transform_1, window_bounds = array<i64: 1, 128>}, {pipeline_mode = #tpu.pipeline_mode<synchronous>, transform_indices = @transform_2, window_bounds = array<i64: 32, 16>}, {pipeline_mode = #tpu.pipeline_mode<synchronous>, transform_indices = @transform_3, window_bounds = array<i64: 32, 1>}, {pipeline_mode = #tpu.pipeline_mode<synchronous>, transform_indices = @transform_4, window_bounds = array<i64: 4, 32>}, {pipeline_mode = #tpu.pipeline_mode<synchronous>, transform_indices = @transform_5, window_bounds = array<i64: 4, 1>}, {transform_indices = @transform_6, window_bounds = array<i64: 1, 128>}]} {
    %c0 = arith.constant 0 : index
    %c0_0 = arith.constant 0 : index
    %0 = vector.load %arg1[%c0, %c0_0] : memref<16x128xf32, #tpu.memory_space<vmem>>, vector<16x128xf32>
    %c0_1 = arith.constant 0 : index
    %c0_2 = arith.constant 0 : index
    %1 = vector.load %arg3[%c0_1, %c0_2] : memref<32x16xf32, #tpu.memory_space<vmem>>, vector<32x16xf32>
    %cst = arith.constant dense<0.000000e+00> : vector<32x128xf32>
    %2 = tpu.matmul %1, %0, %cst {dimension_numbers = #tpu.dot_dimension_numbers<[1], [0], [0], [1], [0, 0, 1, 1], [], []>} : vector<32x16xf32>, vector<16x128xf32>, vector<32x128xf32> -> vector<32x128xf32>
    %c0_3 = arith.constant 0 : index
    %c0_4 = arith.constant 0 : index
    %3 = vector.load %arg4[%c0_3, %c0_4] : memref<32x1xf32, #tpu.memory_space<vmem>>, vector<32x1xf32>
    %4 = vector.broadcast %3 : vector<32x1xf32> to vector<32x128xf32>
    %5 = arith.addf %2, %4 : vector<32x128xf32>
    %cst_5 = arith.constant 0.000000e+00 : f32
    %6 = vector.broadcast %cst_5 : f32 to vector<32x128xf32>
    %7 = arith.maximumf %5, %6 : vector<32x128xf32>
    %c0_6 = arith.constant 0 : index
    %c0_7 = arith.constant 0 : index
    %8 = vector.load %arg5[%c0_6, %c0_7] : memref<4x32xf32, #tpu.memory_space<vmem>>, vector<4x32xf32>
    %cst_8 = arith.constant dense<0.000000e+00> : vector<4x128xf32>
    %9 = tpu.matmul %8, %7, %cst_8 {dimension_numbers = #tpu.dot_dimension_numbers<[1], [0], [0], [1], [0, 0, 1, 1], [], []>} : vector<4x32xf32>, vector<32x128xf32>, vector<4x128xf32> -> vector<4x128xf32>
    %c0_9 = arith.constant 0 : index
    %c0_10 = arith.constant 0 : index
    %10 = vector.load %arg6[%c0_9, %c0_10] : memref<4x1xf32, #tpu.memory_space<vmem>>, vector<4x1xf32>
    %11 = vector.broadcast %10 : vector<4x1xf32> to vector<4x128xf32>
    %12 = arith.addf %9, %11 : vector<4x128xf32>
    %c0_11 = arith.constant 0 : index
    %c0_12 = arith.constant 0 : index
    %13 = vector.load %arg2[%c0_11, %c0_12] : memref<1x128xi32, #tpu.memory_space<vmem>>, vector<1x128xi32>
    %14 = tpu.iota {dimensions = array<i32: 0>} : vector<4x128xi32>
    %15 = vector.broadcast %13 : vector<1x128xi32> to vector<4x128xi32>
    %16 = arith.cmpi eq, %14, %15 : vector<4x128xi32>
    %cst_13 = arith.constant 0.000000e+00 : f32
    %17 = vector.broadcast %cst_13 : f32 to vector<4x128xf32>
    %18 = arith.select %16, %12, %17 : vector<4x128xi1>, vector<4x128xf32>
    %cst_14 = arith.constant dense<0.000000e+00> : vector<128xf32>
    %19 = vector.multi_reduction <add>, %18, %cst_14 [0] : vector<4x128xf32> to vector<128xf32>
    %20 = vector.shape_cast %19 : vector<128xf32> to vector<1x128xf32>
    %c0_15 = arith.constant 0 : index
    %c0_16 = arith.constant 0 : index
    %21 = vector.load %arg7[%c0_15, %c0_16] : memref<1x128xf32, #tpu.memory_space<vmem>>, vector<1x128xf32>
    tpu.vector_store %arg7[%c0_15, %c0_16], %20 {strides = array<i32>} : memref<1x128xf32, #tpu.memory_space<vmem>>, vector<1x128xf32>,
    return
  }
  func.func @transform_0(%arg0: i32) -> (i32, i32) {
    %c0_i32 = arith.constant 0 : i32
    %c0_i32_0 = arith.constant 0 : i32
    return %c0_i32, %arg0 : i32, i32
  }
  func.func @transform_1(%arg0: i32) -> (i32, i32) {
    %c0_i32 = arith.constant 0 : i32
    %c0_i32_0 = arith.constant 0 : i32
    return %c0_i32, %arg0 : i32, i32
  }
  func.func @transform_2(%arg0: i32) -> (i32, i32) {
    %c0_i32 = arith.constant 0 : i32
    %c0_i32_0 = arith.constant 0 : i32
    %c0_i32_1 = arith.constant 0 : i32
    return %c0_i32, %c0_i32_0 : i32, i32
  }
  func.func @transform_3(%arg0: i32) -> (i32, i32) {
    %c0_i32 = arith.constant 0 : i32
    %c0_i32_0 = arith.constant 0 : i32
    %c0_i32_1 = arith.constant 0 : i32
    return %c0_i32, %c0_i32_0 : i32, i32
  }
  func.func @transform_4(%arg0: i32) -> (i32, i32) {
    %c0_i32 = arith.constant 0 : i32
    %c0_i32_0 = arith.constant 0 : i32
    %c0_i32_1 = arith.constant 0 : i32
    return %c0_i32, %c0_i32_0 : i32, i32
  }
  func.func @transform_5(%arg0: i32) -> (i32, i32) {
    %c0_i32 = arith.constant 0 : i32
    %c0_i32_0 = arith.constant 0 : i32
    %c0_i32_1 = arith.constant 0 : i32
    return %c0_i32, %c0_i32_0 : i32, i32
  }
  func.func @transform_6(%arg0: i32) -> (i32, i32) {
    %c0_i32 = arith.constant 0 : i32
    %c0_i32_0 = arith.constant 0 : i32
    return %c0_i32, %arg0 : i32, i32
  }
}

</mosaic_0001>

<llo_original>
// kernel: tpu_custom_call.1
$region0: #{tpu_custom_call.1}
  #allocation0 [shape = 'u32[]', space=smem, size = 0x4, offset = 0x4, fixed_abs, tag = 'smem constant byte address 0x4 - core index']
  #allocation1 [shape = 'u32[144,128]{1,0:T(1,128)}', space=vmem, size = 0x12000, scoped, tag = 'internal scratch']
  %s0 = inlined_call_operand.vmem [shape: f32[16,128], index: 0, kind: input, shape index: {}]
  %s1 = inlined_call_operand.vmem [shape: s32[1,128], index: 1, kind: input, shape index: {}]
  %s2 = inlined_call_operand.vmem [shape: f32[32,16], index: 2, kind: input, shape index: {}]
  %s3 = inlined_call_operand.vmem [shape: f32[32,1], index: 3, kind: input, shape index: {}]
  %s4 = inlined_call_operand.vmem [shape: f32[4,32], index: 4, kind: input, shape index: {}]
  %s5 = inlined_call_operand.vmem [shape: f32[4,1], index: 5, kind: input, shape index: {}]
  %s6 = inlined_call_operand.hbm [shape: f32[1,128], index: 6, kind: output, shape index: {}]
  %s7 = sld [smem:[#allocation0]]
  $region34: #{tpu_custom_call.1} parent=0
    _
  %s9 = ssub.s32 1, %s7
  %s10 = scalar_select 0, %s9, %s7
  $region1: #{tpu_custom_call.1} parent=0
    #allocation2 [shape = 'u8[512]{0}', space=vmem, size = 0x400, scoped, tag = 'output window, operand 0, single buffered']
    #allocation3 [shape = 's32[1]{0}', space=sflag, size = 0x4, scoped, tag = 'scoped memory for tpu_custom_call.1']
    %11 = vsyncpa [#allocation3], 0
    // Predicated region
    $region2: #{tpu_custom_call.1} parent=1 // pred_check
      _
    $region3: #{tpu_custom_call.1} parent=1 // pred_check_branch
      %13 = sbr.rel (0) target = $region5
    $region4: #{tpu_custom_call.1} parent=1 // pred_region
      _
    $region5: #{tpu_custom_call.1} parent=1 // pred_fallthru
      _
    // Predicated region
    $region6: #{tpu_custom_call.1} parent=1 // pred_check
      _
    $region7: #{tpu_custom_call.1} parent=1 // pred_check_branch
      %15 = sbr.rel (0) target = $region9
    $region8: #{tpu_custom_call.1} parent=1 // pred_region
      _
    $region9: #{tpu_custom_call.1} parent=1 // pred_fallthru
      _
    // Predicated region
    $region10: #{tpu_custom_call.1} parent=1 // pred_check
      _
    $region11: #{tpu_custom_call.1} parent=1 // pred_check_branch
      %17 = sbr.rel (0) target = $region13
    $region12: #{tpu_custom_call.1} parent=1 // pred_region
      _
    $region13: #{tpu_custom_call.1} parent=1 // pred_fallthru
      _
    // Predicated region
    $region14: #{tpu_custom_call.1} parent=1 // pred_check
      _
    $region15: #{tpu_custom_call.1} parent=1 // pred_check_branch
      %19 = sbr.rel (0) target = $region17
    $region16: #{tpu_custom_call.1} parent=1 // pred_region
      _
    $region17: #{tpu_custom_call.1} parent=1 // pred_fallthru
      _
    // Predicated region
    $region18: #{tpu_custom_call.1} parent=1 // pred_check
      _
    $region19: #{tpu_custom_call.1} parent=1 // pred_check_branch
      %21 = sbr.rel (0) target = $region21
    $region20: #{tpu_custom_call.1} parent=1 // pred_region
      _
    $region21: #{tpu_custom_call.1} parent=1 // pred_fallthru
      _
    // Predicated region
    $region22: #{tpu_custom_call.1} parent=1 // pred_check
      _
    $region23: #{tpu_custom_call.1} parent=1 // pred_check_branch
      %23 = sbr.rel (0) target = $region25
    $region24: #{tpu_custom_call.1} parent=1 // pred_region
      _
    $region25: #{tpu_custom_call.1} parent=1 // pred_fallthru
      _
    %v24 = vld [vmem:[%s0] sm:$0xff]
    %v25 = vld [vmem:[%s0 + $0x8] sm:$0xff]
    %v26 = vld [vmem:[%s2] sm:$0xff]
    %v27 = vld [vmem:[%s2 + $0x8] sm:$0xff]
    %v28 = vld [vmem:[%s2 + $0x10] sm:$0xff]
    %v29 = vld [vmem:[%s2 + $0x18] sm:$0xff]
    %v30 = vld [vmem:[%s3] sm:$0xff]
    %v31 = vld [vmem:[%s3 + $0x8] sm:$0xff]
    %v32 = vld [vmem:[%s3 + $0x10] sm:$0xff]
    %v33 = vld [vmem:[%s3 + $0x18] sm:$0xff]
    %35 = vset.pattern.permute.xlu0 0
    %36 = vperm.xlu0 %35, %v30
    %v37 = vpop.permute.xlu0 %36
    %40 = vset.pattern.permute.xlu0 0
    %41 = vperm.xlu0 %40, %v31
    %v42 = vpop.permute.xlu0 %41
    %45 = vset.pattern.permute.xlu0 0
    %46 = vperm.xlu0 %45, %v32
    %v47 = vpop.permute.xlu0 %46
    %50 = vset.pattern.permute.xlu0 0
    %51 = vperm.xlu0 %50, %v33
    %v52 = vpop.permute.xlu0 %51
    %vm54 = vcmask 130048
    %v56 = vsel %vm54, %v26, 0
    %v59 = vsel %vm54, %v27, 0
    %v62 = vsel %vm54, %v28, 0
    %v65 = vsel %vm54, %v29, 0
    %67 = vmatprep.subr.mxu0 0.0
    %68 = vmatpush1.msra.mxu0 %v24
    %69 = vmatprep.subr.mxu0 0.0
    %70 = vmatpush1.msra.mxu0 %v25
    %71 = vmatprep.subr.mxu0 0.0
    %72 = vmatpush1.msra.mxu0 0.0
    %73 = vmatprep.subr.mxu0 0.0
    %74 = vmatpush1.msra.mxu0 0.0
    %75 = vmatprep.subr.mxu0 0.0
    %76 = vmatpush1.msra.mxu0 0.0
    %77 = vmatprep.subr.mxu0 0.0
    %78 = vmatpush1.msra.mxu0 0.0
    %79 = vmatprep.subr.mxu0 0.0
    %80 = vmatpush1.msra.mxu0 0.0
    %81 = vmatprep.subr.mxu0 0.0
    %82 = vmatpush1.msra.mxu0 0.0
    %83 = vmatprep.subr.mxu0 0.0
    %84 = vmatpush1.msra.mxu0 0.0
    %85 = vmatprep.subr.mxu0 0.0
    %86 = vmatpush1.msra.mxu0 0.0
    %87 = vmatprep.subr.mxu0 0.0
    %88 = vmatpush1.msra.mxu0 0.0
    %89 = vmatprep.subr.mxu0 0.0
    %90 = vmatpush1.msra.mxu0 0.0
    %91 = vmatprep.subr.mxu0 0.0
    %92 = vmatpush1.msra.mxu0 0.0
    %93 = vmatprep.subr.mxu0 0.0
    %94 = vmatpush1.msra.mxu0 0.0
    %95 = vmatprep.subr.mxu0 0.0
    %96 = vmatpush1.msra.mxu0 0.0
    %97 = vmatprep.subr.mxu0 0.0
    %98 = vmatpush1.msra.mxu0 0.0
    %99 = vmatprep.subr.mxu0 0.0
    %100 = vmatpush1.msra.mxu0 0.0
    %101 = vmatprep.subr.mxu0 0.0
    %102 = vmatpush1.msra.mxu0 0.0
    %103 = vmatprep.subr.mxu0 0.0
    %104 = vmatpush1.msra.mxu0 0.0
    %105 = vmatprep.subr.mxu0 0.0
    %106 = vmatpush1.msra.mxu0 0.0
    %107 = vmatprep.subr.mxu0 0.0
    %108 = vmatpush1.msra.mxu0 0.0
    %109 = vmatprep.subr.mxu0 0.0
    %110 = vmatpush1.msra.mxu0 0.0
    %111 = vmatprep.subr.mxu0 0.0
    %112 = vmatpush1.msra.mxu0 0.0
    %113 = vmatprep.subr.mxu0 0.0
    %114 = vmatpush1.msra.mxu0 0.0
    %115 = vmatprep.subr.mxu0 0.0
    %116 = vmatpush1.msra.mxu0 0.0
    %117 = vmatprep.subr.mxu0 0.0
    %118 = vmatpush1.msra.mxu0 0.0
    %119 = vmatprep.subr.mxu0 0.0
    %120 = vmatpush1.msra.mxu0 0.0
    %121 = vmatprep.subr.mxu0 0.0
    %122 = vmatpush1.msra.mxu0 0.0
    %123 = vmatprep.subr.mxu0 0.0
    %124 = vmatpush1.msra.mxu0 0.0
    %125 = vmatprep.subr.mxu0 0.0
    %126 = vmatpush1.msra.mxu0 0.0
    %127 = vmatprep.subr.mxu0 0.0
    %128 = vmatpush1.msra.mxu0 0.0
    %129 = vmatprep.subr.mxu0 0.0
    %130 = vmatpush1.msra.mxu0 0.0
    %131 = vmatprep.mubr.f32.mxu0 0.0
    %132 = vmatmul.mubr.f32.gmra.mrb[0].mxu0 %v56
    %v133 = vpop.f32.mrb[0].mxu0
    %v134 = vadd.f32 %v37, %v133
    %v135 = vpop.f32.mrb[0].mxu0
    %136 = vmatprep.mubr.f32.mxu0 0.0
    %137 = vmatmul.mubr.f32.gmra.mrb[0].mxu0 %v59
    %v138 = vpop.f32.mrb[0].mxu0
    %v139 = vadd.f32 %v42, %v138
    %v140 = vpop.f32.mrb[0].mxu0
    %141 = vmatprep.mubr.f32.mxu0 0.0
    %142 = vmatmul.mubr.f32.gmra.mrb[0].mxu0 %v62
    %v143 = vpop.f32.mrb[0].mxu0
    %v144 = vadd.f32 %v47, %v143
    %v145 = vpop.f32.mrb[0].mxu0
    %146 = vmatprep.mubr.f32.mxu0 0.0
    %147 = vmatmul.mubr.f32.gmra.mrb[0].mxu0 %v65
    %v148 = vpop.f32.mrb[0].mxu0
    %v149 = vadd.f32 %v52, %v148
    %v150 = vpop.f32.mrb[0].mxu0
    %151 = vdwg.mxu0
    %v152 = vmax.f32 %v134, 0.0
    %v153 = vmax.f32 %v139, 0.0
    %v154 = vmax.f32 %v144, 0.0
    %v155 = vmax.f32 %v149, 0.0
    %v156 = vld [vmem:[%s4] sm:$0xf]
    %v157 = vld [vmem:[%s5] sm:$0xf]
    %159 = vset.pattern.permute.xlu0 0
    %160 = vperm.xlu0 %159, %v157
    %v161 = vpop.permute.xlu0 %160
    %vm163 = vcmask 261120
    %v165 = vsel %vm163, %v156, 0
    %167 = vmatprep.subr.mxu0 0.0
    %168 = vmatpush1.msra.mxu0 %v152
    %169 = vmatprep.subr.mxu0 0.0
    %170 = vmatpush1.msra.mxu0 %v153
    %171 = vmatprep.subr.mxu0 0.0
    %172 = vmatpush1.msra.mxu0 %v154
    %173 = vmatprep.subr.mxu0 0.0
    %174 = vmatpush1.msra.mxu0 %v155
    %175 = vmatprep.subr.mxu0 0.0
    %176 = vmatpush1.msra.mxu0 0.0
    %177 = vmatprep.subr.mxu0 0.0
    %178 = vmatpush1.msra.mxu0 0.0
    %179 = vmatprep.subr.mxu0 0.0
    %180 = vmatpush1.msra.mxu0 0.0
    %181 = vmatprep.subr.mxu0 0.0
    %182 = vmatpush1.msra.mxu0 0.0
    %183 = vmatprep.subr.mxu0 0.0
    %184 = vmatpush1.msra.mxu0 0.0
    %185 = vmatprep.subr.mxu0 0.0
    %186 = vmatpush1.msra.mxu0 0.0
    %187 = vmatprep.subr.mxu0 0.0
    %188 = vmatpush1.msra.mxu0 0.0
    %189 = vmatprep.subr.mxu0 0.0
    %190 = vmatpush1.msra.mxu0 0.0
    %191 = vmatprep.subr.mxu0 0.0
    %192 = vmatpush1.msra.mxu0 0.0
    %193 = vmatprep.subr.mxu0 0.0
    %194 = vmatpush1.msra.mxu0 0.0
    %195 = vmatprep.subr.mxu0 0.0
    %196 = vmatpush1.msra.mxu0 0.0
    %197 = vmatprep.subr.mxu0 0.0
    %198 = vmatpush1.msra.mxu0 0.0
    %199 = vmatprep.subr.mxu0 0.0
    %200 = vmatpush1.msra.mxu0 0.0
    %201 = vmatprep.subr.mxu0 0.0
    %202 = vmatpush1.msra.mxu0 0.0
    %203 = vmatprep.subr.mxu0 0.0
    %204 = vmatpush1.msra.mxu0 0.0
    %205 = vmatprep.subr.mxu0 0.0
    %206 = vmatpush1.msra.mxu0 0.0
    %207 = vmatprep.subr.mxu0 0.0
    %208 = vmatpush1.msra.mxu0 0.0
    %209 = vmatprep.subr.mxu0 0.0
    %210 = vmatpush1.msra.mxu0 0.0
    %211 = vmatprep.subr.mxu0 0.0
    %212 = vmatpush1.msra.mxu0 0.0
    %213 = vmatprep.subr.mxu0 0.0
    %214 = vmatpush1.msra.mxu0 0.0
    %215 = vmatprep.subr.mxu0 0.0
    %216 = vmatpush1.msra.mxu0 0.0
    %217 = vmatprep.subr.mxu0 0.0
    %218 = vmatpush1.msra.mxu0 0.0
    %219 = vmatprep.subr.mxu0 0.0
    %220 = vmatpush1.msra.mxu0 0.0
    %221 = vmatprep.subr.mxu0 0.0
    %222 = vmatpush1.msra.mxu0 0.0
    %223 = vmatprep.subr.mxu0 0.0
    %224 = vmatpush1.msra.mxu0 0.0
    %225 = vmatprep.subr.mxu0 0.0
    %226 = vmatpush1.msra.mxu0 0.0
    %227 = vmatprep.subr.mxu0 0.0
    %228 = vmatpush1.msra.mxu0 0.0
    %229 = vmatprep.subr.mxu0 0.0
    %230 = vmatpush1.msra.mxu0 0.0
    %231 = vmatprep.mubr.f32.mxu0 0.0
    %232 = vmatmul.mubr.f32.gmra.mrb[0].mxu0 %v165
    %v233 = vpop.f32.mrb[0].mxu0
    %v234 = vadd.f32 %v161, %v233
    %v235 = vpop.f32.mrb[0].mxu0
    %236 = vdwg.mxu0
    %v237 = vld [vmem:[%s1] sm:$0x1]
    %v238 = vlaneseq
    %v239 = vshrl.u32 %v238, 7
    %v240 = vlaneseq
    %v241 = vshrl.u32 %v240, 7
    %v242 = vsub.s32 0, %v241
    %v243 = vrot.slane %v237, %v242
    %vm244 = vcmp.eq.s32.totalorder %v239, %v243
    %v245 = vsel %vm244, %v234, 0.0
    %vm246 = vcmask 1043456
    %v247 = vsel %vm246, %v245, 0.0
    %v248 = vrot.slane %v247, 4
    %v249 = vadd.f32 %v247, %v248
    %v250 = vrot.slane %v249, 2
    %v251 = vadd.f32 %v249, %v250
    %v252 = vrot.slane %v251, 1
    %v253 = vadd.f32 %v251, %v252
    %254 = vst [vmem:[#allocation2] sm:$0x1] %v253
    // Predicated region
    $region26: #{tpu_custom_call.1} parent=1 // pred_check
      _
    $region27: #{tpu_custom_call.1} parent=1 // pred_check_branch
      %256 = sbr.rel (0) target = $region29
    $region28: #{tpu_custom_call.1} parent=1 // pred_region
      %s258 = ssub.s32 16, 16
      %259 = vsyncadd [#allocation3], %s258
      %s261 = sshll.u32 [#allocation2], 4
      %s262 = int_to_ptr.vmem [resolvable:$true] %s261
      %264 = dma.vmem_to_hbm [thread:$0]  %s262, 16, %s6, [#allocation3]
    $region29: #{tpu_custom_call.1} parent=1 // pred_fallthru
      _
    // Predicated region
    $region30: #{tpu_custom_call.1} parent=1 // pred_check
      _
    $region31: #{tpu_custom_call.1} parent=1 // pred_check_branch
      %266 = sbr.rel (0) target = $region33
    $region32: #{tpu_custom_call.1} parent=1 // pred_region
      %267 = dma.done [#allocation3], 16
    $region33: #{tpu_custom_call.1} parent=1 // pred_fallthru
      _
    %268 = vsyncpa [#allocation3], 1

</llo_original>
